<compile_context>
chip_gen: v5e
topology: v5e:2x2
jax: 0.10.0
libtpu: 0.0.40
codegen_flags: <defaults>
</compile_context>

<pallas_src>
from functools import partial

import numpy as np
import jax
import jax.numpy as jnp
from jax import lax
from jax.experimental import pallas as pl
from jax.experimental.pallas import tpu as pltpu

FILL = -1e16          # same fill_value as the PyTorch scatter_sort
_BISECT_ITERS = 30    # interval [-1, 0] -> width 2^-30; support set then exact


def _sparsemax_kernel(dense_ref, thr_ref):
    """dense_ref: (Mp, TILE_B) — one group per lane/column, pads = FILL.
    thr_ref:   (8, TILE_B)   — per-group threshold (max + tau), lane-dense."""
    z = dense_ref[...]                                   # (Mp, TB)

    valid = z > (FILL * 0.5)                             # real entries
    m = jnp.max(z, axis=0, keepdims=True)                # (1, TB) per-group max
    # shifted scores; pads -> -2 so they never enter the support and
    # contribute 0 to relu sums for any tau in [-1, 0]
    zs = jnp.where(valid, z - m, -2.0)                   # (Mp, TB)

    # --- bisection for tau*:  f(tau) = sum relu(zs - tau) is monotone,
    #     f(-1) >= 1 (max element alone contributes 1), f(0) = 0.
    lo0 = jnp.full(m.shape, -1.0, dtype=jnp.float32)
    hi0 = jnp.zeros_like(m)

    def body(_, carry):
        lo, hi = carry
        mid = 0.5 * (lo + hi)
        f = jnp.sum(jnp.maximum(zs - mid, 0.0), axis=0, keepdims=True)
        ge = f >= 1.0
        return jnp.where(ge, mid, lo), jnp.where(ge, hi, mid)

    lo, hi = lax.fori_loop(0, _BISECT_ITERS, body, (lo0, hi0))
    tau0 = 0.5 * (lo + hi)

    # exact tau from the identified support (same value torch gathers from the
    # sorted cumsum): tau = (sum over support - 1) / K
    support = zs > tau0                                  # pads (-2) never pass
    k = jnp.sum(support.astype(jnp.float32), axis=0, keepdims=True)
    s = jnp.sum(jnp.where(support, zs, 0.0), axis=0, keepdims=True)
    tau = (s - 1.0) / jnp.maximum(k, 1.0)                # guards all-pad cols

    # out[n] = max(x[n] - (m + tau)[group], 0) is applied in the glue
    thr_ref[...] = jnp.broadcast_to(m + tau, thr_ref.shape)


def _ceil_to(v, m):
    return ((v + m - 1) // m) * m


@partial(jax.jit, static_argnames=("num_groups", "max_nodes"))
def sparsemax(x, batch, *, num_groups, max_nodes):
    """Pallas sparsemax forward.

    x: (N,) f32 flat node scores.
    batch: (N,) int32 group ids (sorted, contiguous, as the torch code assumes).
    num_groups, max_nodes: static Python ints so the wrapper is jit-able with
      no host sync / data-dependent shapes.
    """
    x = jnp.asarray(x, jnp.float32)
    batch = jnp.asarray(batch, jnp.int32)
    N = x.shape[0]

    B = int(num_groups)
    M = int(max_nodes)

    # padded sizes: group length on sublanes (mult of 8), groups on lanes
    Mp = _ceil_to(max(M, 1), 8)
    Bp = _ceil_to(max(B, 1), 128)

    # tile over groups, targeting ~2 MiB input blocks
    target_block_bytes = 2 << 20
    tile_cap = max(128, (target_block_bytes // (Mp * 4)) // 128 * 128)
    TILE_B = min(Bp, tile_cap)
    # v7x megacore: prefer >= 2 parallel grid steps when there are enough groups
    if Bp > 128 and Bp // TILE_B < 2:
        TILE_B = max(128, _ceil_to(TILE_B // 2, 128))
    Bp = _ceil_to(Bp, TILE_B)

    block_bytes = Mp * TILE_B * 4
    vmem_limit = int(min(48 << 20, max(32 << 20, 12 * block_bytes)))

    # position of each node inside its group (jnp only; jit-friendly)
    counts = jnp.zeros((B,), jnp.int32).at[batch].add(1)
    cum = jnp.concatenate([jnp.zeros((1,), jnp.int32), jnp.cumsum(counts)[:-1]])
    pos = jnp.arange(N, dtype=jnp.int32) - cum[batch]

    # densify exactly like torch scatter_sort's dense_x, but groups on lanes
    dense = jnp.full((Mp, Bp), FILL, dtype=jnp.float32).at[pos, batch].set(x)

    thr = pl.pallas_call(
        _sparsemax_kernel,
        out_shape=jax.ShapeDtypeStruct((8, Bp), jnp.float32),
        grid=(Bp // TILE_B,),
        in_specs=[pl.BlockSpec((Mp, TILE_B), lambda i: (0, i))],
        out_specs=pl.BlockSpec((8, TILE_B), lambda i: (0, i)),
        compiler_params=pltpu.CompilerParams(
            dimension_semantics=("parallel",),
            vmem_limit_bytes=vmem_limit),
    )(dense)

    # clamp on the flat array in original node order (contiguous row gather)
    return jnp.maximum(x - thr[0, batch], 0.0)


def _sparsemax_ref(x_np, batch_np, B):
    """Pure-numpy reference of SparsemaxFunction.forward (per group)."""
    out = np.zeros_like(x_np)
    for g in range(B):
        idx = np.where(batch_np == g)[0]
        v = x_np[idx] - x_np[idx].max()
        z = np.sort(v)[::-1]
        cs = np.cumsum(z) - 1.0
        rhos = np.arange(1, len(z) + 1, dtype=np.float64)
        support = rhos * z > cs
        K = int(support.sum())
        tau = cs[K - 1] / K
        out[idx] = np.clip(v - tau, 0.0, None)
    return out


def _check(x, batch, B, M):
    out = sparsemax(x, batch, num_groups=B, max_nodes=M)
    out = jax.block_until_ready(out)

    out_np = np.asarray(out)
    x_np = np.asarray(x).astype(np.float64)
    batch_np = np.asarray(batch)

    # sparsemax invariants: non-negative, each group sums to 1
    sums = np.zeros(B)
    np.add.at(sums, batch_np, out_np)
    assert out_np.shape == x_np.shape
    assert np.all(out_np >= 0.0)
    assert np.allclose(sums, 1.0, atol=1e-4)

    # match the reference forward
    ref = _sparsemax_ref(x_np, batch_np, B)
    assert np.allclose(out_np, ref, atol=1e-5)


if __name__ == "__main__":
    key = jax.random.PRNGKey(0)
    k1, k2 = jax.random.split(key)

    # test 1: tiny graph batch, 3 graphs with 5, 8, 3 nodes -> N = 16
    sizes = [5, 8, 3]
    B1 = len(sizes)
    batch1 = jnp.asarray(np.repeat(np.arange(B1), sizes), jnp.int32)
    x1 = jax.random.normal(k1, (int(sum(sizes)),), dtype=jnp.float32)
    _check(x1, batch1, B1, int(max(sizes)))

    # test 2: enough groups to exercise a multi-step parallel grid (>128 groups)
    sizes2 = [(i % 12) + 1 for i in range(150)]
    B2 = len(sizes2)
    batch2 = jnp.asarray(np.repeat(np.arange(B2), sizes2), jnp.int32)
    x2 = jax.random.normal(k2, (int(sum(sizes2)),), dtype=jnp.float32)
    _check(x2, batch2, B2, int(max(sizes2)))

    print("KERNEL_OK")
</pallas_src>

<mosaic_0001>
module attributes {stable_mosaic.version = 11 : i64} {
  func.func @_sparsemax_kernel(%arg0: i32, %arg1: memref<8x128xf32, #tpu.memory_space<vmem>>, %arg2: memref<8x128xf32, #tpu.memory_space<vmem>>) attributes {dimension_semantics = [#tpu.dimension_semantics<parallel>], iteration_bounds = array<i64: 1>, scalar_prefetch = 0 : i64, scratch_operands = 0 : i64, tpu.core_type = #tpu.core_type<tc>, window_params = [{transform_indices = @transform_0, window_bounds = array<i64: 8, 128>}, {transform_indices = @transform_1, window_bounds = array<i64: 8, 128>}]} {
    %c0 = arith.constant 0 : index
    %c0_0 = arith.constant 0 : index
    %0 = vector.load %arg1[%c0, %c0_0] : memref<8x128xf32, #tpu.memory_space<vmem>>, vector<8x128xf32>
    %cst = arith.constant -5.000000e+15 : f32
    %1 = vector.broadcast %cst : f32 to vector<8x128xf32>
    %2 = arith.cmpf ogt, %0, %1 : vector<8x128xf32>
    %cst_1 = arith.constant dense<0xFF800000> : vector<128xf32>
    %3 = vector.multi_reduction <maximumf>, %0, %cst_1 [0] : vector<8x128xf32> to vector<128xf32>
    %4 = vector.shape_cast %3 : vector<128xf32> to vector<1x128xf32>
    %5 = vector.broadcast %4 : vector<1x128xf32> to vector<8x128xf32>
    %6 = arith.subf %0, %5 : vector<8x128xf32>
    %cst_2 = arith.constant -2.000000e+00 : f32
    %7 = vector.broadcast %cst_2 : f32 to vector<8x128xf32>
    %8 = arith.select %2, %6, %7 : vector<8x128xi1>, vector<8x128xf32>
    %cst_3 = arith.constant -1.000000e+00 : f32
    %9 = vector.broadcast %cst_3 : f32 to vector<1x128xf32>
    %cst_4 = arith.constant 0.000000e+00 : f32
    %10 = vector.broadcast %cst_4 : f32 to vector<1x128xf32>
    %c0_i32 = arith.constant 0 : i32
    %c30_i32 = arith.constant 30 : i32
    %11 = arith.addi %c0_i32, %c30_i32 : i32
    %c1_i32 = arith.constant 1 : i32
    %12:2 = scf.for %arg3 = %c0_i32 to %11 step %c1_i32 iter_args(%arg4 = %9, %arg5 = %10) -> (vector<1x128xf32>, vector<1x128xf32>)  : i32 {
      %35 = arith.addf %arg4, %arg5 : vector<1x128xf32>
      %cst_13 = arith.constant 5.000000e-01 : f32
      %36 = vector.broadcast %cst_13 : f32 to vector<1x128xf32>
      %37 = arith.mulf %36, %35 : vector<1x128xf32>
      %38 = vector.broadcast %37 : vector<1x128xf32> to vector<8x128xf32>
      %39 = arith.subf %8, %38 : vector<8x128xf32>
      %cst_14 = arith.constant 0.000000e+00 : f32
      %40 = vector.broadcast %cst_14 : f32 to vector<8x128xf32>
      %41 = arith.maximumf %39, %40 : vector<8x128xf32>
      %cst_15 = arith.constant dense<0.000000e+00> : vector<128xf32>
      %42 = vector.multi_reduction <add>, %41, %cst_15 [0] : vector<8x128xf32> to vector<128xf32>
      %43 = vector.shape_cast %42 : vector<128xf32> to vector<1x128xf32>
      %cst_16 = arith.constant 1.000000e+00 : f32
      %44 = vector.broadcast %cst_16 : f32 to vector<1x128xf32>
      %45 = arith.cmpf oge, %43, %44 : vector<1x128xf32>
      %46 = arith.select %45, %37, %arg4 : vector<1x128xi1>, vector<1x128xf32>
      %47 = arith.select %45, %arg5, %37 : vector<1x128xi1>, vector<1x128xf32>
      scf.yield %46, %47 : vector<1x128xf32>, vector<1x128xf32>
    }
    %13 = arith.addf %12#0, %12#1 : vector<1x128xf32>
    %cst_5 = arith.constant 5.000000e-01 : f32
    %14 = vector.broadcast %cst_5 : f32 to vector<1x128xf32>
    %15 = arith.mulf %14, %13 : vector<1x128xf32>
    %16 = vector.broadcast %15 : vector<1x128xf32> to vector<8x128xf32>
    %17 = arith.cmpf ogt, %8, %16 : vector<8x128xf32>
    %18 = arith.extui %17 : vector<8x128xi1> to vector<8x128xi32>
    %19 = arith.sitofp %18 : vector<8x128xi32> to vector<8x128xf32>
    %cst_6 = arith.constant dense<0.000000e+00> : vector<128xf32>
    %20 = vector.multi_reduction <add>, %19, %cst_6 [0] : vector<8x128xf32> to vector<128xf32>
    %21 = vector.shape_cast %20 : vector<128xf32> to vector<1x128xf32>
    %cst_7 = arith.constant 0.000000e+00 : f32
    %22 = vector.broadcast %cst_7 : f32 to vector<8x128xf32>
    %23 = arith.select %17, %8, %22 : vector<8x128xi1>, vector<8x128xf32>
    %cst_8 = arith.constant dense<0.000000e+00> : vector<128xf32>
    %24 = vector.multi_reduction <add>, %23, %cst_8 [0] : vector<8x128xf32> to vector<128xf32>
    %25 = vector.shape_cast %24 : vector<128xf32> to vector<1x128xf32>
    %cst_9 = arith.constant 1.000000e+00 : f32
    %26 = vector.broadcast %cst_9 : f32 to vector<1x128xf32>
    %27 = arith.subf %25, %26 : vector<1x128xf32>
    %cst_10 = arith.constant 1.000000e+00 : f32
    %28 = vector.broadcast %cst_10 : f32 to vector<1x128xf32>
    %29 = arith.maximumf %21, %28 : vector<1x128xf32>
    %30 = arith.divf %27, %29 : vector<1x128xf32>
    %31 = arith.addf %4, %30 : vector<1x128xf32>
    %32 = vector.shape_cast %31 : vector<1x128xf32> to vector<1x128xf32>
    %33 = vector.broadcast %32 : vector<1x128xf32> to vector<8x128xf32>
    %c0_11 = arith.constant 0 : index
    %c0_12 = arith.constant 0 : index
    %34 = vector.load %arg2[%c0_11, %c0_12] : memref<8x128xf32, #tpu.memory_space<vmem>>, vector<8x128xf32>
    tpu.vector_store %arg2[%c0_11, %c0_12], %33 {strides = array<i32>} : memref<8x128xf32, #tpu.memory_space<vmem>>, vector<8x128xf32>,
    return
  }
  func.func @transform_0(%arg0: i32) -> (i32, i32) {
    %c0_i32 = arith.constant 0 : i32
    %c0_i32_0 = arith.constant 0 : i32
    return %c0_i32, %arg0 : i32, i32
  }
  func.func @transform_1(%arg0: i32) -> (i32, i32) {
    %c0_i32 = arith.constant 0 : i32
    %c0_i32_0 = arith.constant 0 : i32
    return %c0_i32, %arg0 : i32, i32
  }
}

</mosaic_0001>

<llo_original>
// kernel: sparsemax.1
$region0: #{sparsemax.1}
  #allocation0 [shape = 'u32[]', space=smem, size = 0x4, offset = 0x4, fixed_abs, tag = 'smem constant byte address 0x4 - core index']
  #allocation1 [shape = 'u32[72,128]{1,0:T(1,128)}', space=vmem, size = 0x9000, scoped, tag = 'internal scratch']
  %s0 = inlined_call_operand.vmem [shape: f32[8,128], index: 0, kind: input, shape index: {}]
  %s1 = inlined_call_operand.vmem [shape: f32[8,128], index: 1, kind: output, shape index: {}]
  %s2 = sld [smem:[#allocation0]]
  $region21: #{sparsemax.1} parent=0
    _
  %s4 = ssub.s32 1, %s2
  %s5 = scalar_select 0, %s4, %s2
  // Predicated region
  $region2: #{sparsemax.1} parent=0 // pred_check
    _
  $region3: #{sparsemax.1} parent=0 // pred_check_branch
    %7 = sbr.rel (0) target = $region5
  $region4: #{sparsemax.1} parent=0 // pred_region
    _
  $region5: #{sparsemax.1} parent=0 // pred_fallthru
    _
  %v8 = vld [vmem:[%s0] sm:$0xff]
  %vm9 = vcmp.gt.f32.partialorder %v8, -5e+15
  %v10 = vrot.slane %v8, 4
  %v11 = vmax.f32 %v8, %v10
  %v12 = vrot.slane %v11, 2
  %v13 = vmax.f32 %v11, %v12
  %v14 = vrot.slane %v13, 1
  %v15 = vmax.f32 %v13, %v14
  %v16 = vsub.f32 %v8, %v15
  %v17 = vsel %vm9, %v16, -2.0
  loop: start=0, step=1, limit=30
  $region6: #{sparsemax.1} parent=0 // loop_pre_header
    _
  $region7: #{sparsemax.1} parent=0 // loop_header
    %s19 = sphi 0, %s23
    %p20 = scmp.ge.s32.totalorder %s19, 30
    %v24 = vphi -1.0, %v37
    %v25 = vphi 0.0, %v38
  $region8: #{sparsemax.1} parent=0 // loop_header_branch
    %22 = sbr.rel (%p20) target = $region12
  $region9: #{sparsemax.1} parent=0 // loop_body
    %v26 = vadd.f32 %v24, %v25
    %v27 = vmul.f32 %v26, 0.5
    %v28 = vsub.f32 %v17, %v27
    %v29 = vmax.f32 %v28, 0.0
    %v30 = vrot.slane %v29, 4
    %v31 = vadd.f32 %v29, %v30
    %v32 = vrot.slane %v31, 2
    %v33 = vadd.f32 %v31, %v32
    %v34 = vrot.slane %v33, 1
    %v35 = vadd.f32 %v33, %v34
    %vm36 = vcmp.ge.f32.partialorder %v35, 1.0
    %v37 = vsel %vm36, %v27, %v24
    %v38 = vsel %vm36, %v25, %v27
  $region10: #{sparsemax.1} parent=0 // loop_footer
    %s23 = sadd.s32 1, %s19
  $region11: #{sparsemax.1} parent=0 // loop_footer_branch
    %18 = sbr.rel target = $region7
  $region12: #{sparsemax.1} parent=0 // loop_exit
    _
  %v39 = vadd.f32 %v24, %v25
  %v40 = vmul.f32 %v39, 0.5
  %vm41 = vcmp.gt.f32.partialorder %v17, %v40
  %v42 = vsel %vm41, 1, 0
  %v43 = vcvt.s32.f32 %v42
  %v44 = vrot.slane %v43, 4
  %v45 = vadd.f32 %v43, %v44
  %v46 = vrot.slane %v45, 2
  %v47 = vadd.f32 %v45, %v46
  %v48 = vrot.slane %v47, 1
  %v49 = vadd.f32 %v47, %v48
  %v50 = vsel %vm41, %v17, 0.0
  %v51 = vrot.slane %v50, 4
  %v52 = vadd.f32 %v50, %v51
  %v53 = vrot.slane %v52, 2
  %v54 = vadd.f32 %v52, %v53
  %v55 = vrot.slane %v54, 1
  %v56 = vadd.f32 %v54, %v55
  %v57 = vsub.f32 %v56, 1.0
  %v58 = vmax.f32 %v49, 1.0
  %v59 = vrcp.pop %v58
  %v60 = vmul.f32 %v58, %v59
  %v61 = vsub.f32 1.0, %v60
  %v62 = vmul.f32 %v59, %v61
  %v63 = vadd.f32 %v59, %v62
  %vm64 = vweird.f32 %v58
  %vm65 = vweird.f32 %v59
  %vm66 = vmor %vm64, %vm65
  %v67 = vsel %vm66, %v59, %v63
  %v68 = vand.u32 2147483647, %v58
  %vm69 = vcmp.eq.f32.partialorder %v68, 8.507059e+37
  %v70 = vand.u32 %v58, 2147483648
  %v71 = vor.u32 1.1754944e-38, %v70
  %v72 = vsel %vm69, %v71, %v67
  %v73 = vmul.f32 %v57, %v72
  %v74 = vadd.f32 %v15, %v73
  %75 = vst [vmem:[%s1] sm:$0xff] %v74
  // Predicated region
  $region13: #{sparsemax.1} parent=0 // pred_check
    _
  $region14: #{sparsemax.1} parent=0 // pred_check_branch
    %77 = sbr.rel (0) target = $region16
  $region15: #{sparsemax.1} parent=0 // pred_region
    _
  $region16: #{sparsemax.1} parent=0 // pred_fallthru
    _
  // Predicated region
  $region17: #{sparsemax.1} parent=0 // pred_check
    _
  $region18: #{sparsemax.1} parent=0 // pred_check_branch
    %79 = sbr.rel (0) target = $region20
  $region19: #{sparsemax.1} parent=0 // pred_region
    _
  $region20: #{sparsemax.1} parent=0 // pred_fallthru
    _

</llo_original>
